<compile_context>
chip_gen: v5e
topology: v5e:2x2
jax: 0.10.0
libtpu: 0.0.40
codegen_flags: <defaults>
</compile_context>

<pallas_src>
import jax
import jax.numpy as jnp
from jax import lax
from jax.experimental import pallas as pl
from jax.experimental.pallas import tpu as pltpu


def _double_conv_kernel(x_ref, m1_ref, b1_ref, m2_ref, b2_ref, o_ref):
    # x_ref:  (1, H, W*Cin)          one batch element, channels innermost
    # m1_ref: (3, W*Cin,  W*Cout)    banded row-matmul matrices for conv1
    # b1_ref: (1, W*Cout)            conv1 bias tiled across W
    # m2_ref: (3, W*Cout, W*Cout)    banded row-matmul matrices for conv2
    # b2_ref: (1, W*Cout)            conv2 bias tiled across W
    # o_ref:  (1, H, W*Cout)         output rows (lane-dense)
    x = x_ref[0]  # (H, W*Cin)

    def conv_rows(a, m_ref, b_ref):
        # out[y] = a[y-1] @ M[0] + a[y] @ M[1] + a[y+1] @ M[2]  (zero rows at
        # the H boundary), then bias + ReLU.  Shifts are pure sublane moves.
        z = jnp.zeros((1, a.shape[1]), a.dtype)
        a_m1 = jnp.concatenate([z, a[:-1, :]], axis=0)   # row y holds a[y-1]
        a_p1 = jnp.concatenate([a[1:, :], z], axis=0)    # row y holds a[y+1]
        acc = jnp.dot(a_m1, m_ref[0], preferred_element_type=jnp.float32)
        acc = acc + jnp.dot(a, m_ref[1], preferred_element_type=jnp.float32)
        acc = acc + jnp.dot(a_p1, m_ref[2], preferred_element_type=jnp.float32)
        return jnp.maximum(acc + b_ref[0], 0.0)

    h1 = conv_rows(x, m1_ref, b1_ref)    # (H, W*Cout) f32, stays in vregs
    h2 = conv_rows(h1, m2_ref, b2_ref)   # (H, W*Cout) f32
    o_ref[...] = h2.reshape(o_ref.shape).astype(o_ref.dtype)


def _make_band_matrices(w_oihw, W):
    """Build (3, W*Cin, W*Cout) banded matrices M[dy] such that a row-level
    matmul reproduces the 3x3 conv (padding=1) along the W axis.

        M[dy][xi*Cin + ci, xo*Cout + co] = w[co, ci, dy, xi - xo + 1]
        (zero when xi - xo + 1 is outside [0, 3): this encodes the W padding)
    """
    Cout, Cin = w_oihw.shape[0], w_oihw.shape[1]
    w = jnp.transpose(w_oihw, (2, 3, 1, 0))            # (dy, dx, ci, co)
    xi = jnp.arange(W)[:, None]                        # input column
    xo = jnp.arange(W)[None, :]                        # output column
    d = xi - xo + 1                                    # dx tap index
    valid = (d >= 0) & (d < 3)                         # (W, W)
    dc = jnp.clip(d, 0, 2)
    blocks = w[:, dc, :, :]                            # (3, W, W, Cin, Cout)
    blocks = jnp.where(valid[None, :, :, None, None], blocks, 0.0)
    m = jnp.transpose(blocks, (0, 1, 3, 2, 4)).reshape(3, W * Cin, W * Cout)
    return m


def double_conv_block(x_nchw, w1_oihw, b1, w2_oihw, b2):
    """Forward pass of DoubleConvBlock. Input/output are NCHW (PyTorch layout)."""
    N, Cin, H, W = x_nchw.shape
    Cout = w1_oihw.shape[0]

    # NCHW -> lane-dense rows (N, H, W*Cin) with channels innermost.
    x_rows = jnp.transpose(x_nchw, (0, 2, 3, 1)).reshape(N, H, W * Cin)

    m1 = _make_band_matrices(w1_oihw, W)               # (3, W*Cin,  W*Cout)
    m2 = _make_band_matrices(w2_oihw, W)               # (3, W*Cout, W*Cout)
    b1_row = jnp.tile(b1, W).reshape(1, W * Cout)
    b2_row = jnp.tile(b2, W).reshape(1, W * Cout)

    out_rows = pl.pallas_call(
        _double_conv_kernel,
        out_shape=jax.ShapeDtypeStruct((N, H, W * Cout), x_nchw.dtype),
        grid_spec=pltpu.PrefetchScalarGridSpec(
            num_scalar_prefetch=0,
            grid=(N,),
            in_specs=[
                pl.BlockSpec((1, H, W * Cin), lambda b: (b, 0, 0)),
                pl.BlockSpec((3, W * Cin, W * Cout), lambda b: (0, 0, 0)),
                pl.BlockSpec((1, W * Cout), lambda b: (0, 0)),
                pl.BlockSpec((3, W * Cout, W * Cout), lambda b: (0, 0, 0)),
                pl.BlockSpec((1, W * Cout), lambda b: (0, 0)),
            ],
            out_specs=pl.BlockSpec((1, H, W * Cout), lambda b: (b, 0, 0)),
        ),
        compiler_params=pltpu.CompilerParams(
            dimension_semantics=("parallel",),
            # NOTE: raise vmem_limit_bytes / add row tiling when scaling to
            # real image sizes; unnecessary at these shapes.
        ),
    )(x_rows, m1, b1_row, m2, b2_row)

    # (N, H, W*Cout) -> NCHW to match the PyTorch module's output layout.
    return jnp.transpose(out_rows.reshape(N, H, W, Cout), (0, 3, 1, 2))


def _reference(x_nchw, w1_oihw, b1, w2_oihw, b2):
    """Pure-JAX reference (lax.conv) for correctness check."""
    dn = ("NCHW", "OIHW", "NCHW")
    h = lax.conv_general_dilated(
        x_nchw, w1_oihw, (1, 1), ((1, 1), (1, 1)), dimension_numbers=dn
    ) + b1.reshape(1, -1, 1, 1)
    h = jnp.maximum(h, 0.0)
    h = lax.conv_general_dilated(
        h, w2_oihw, (1, 1), ((1, 1), (1, 1)), dimension_numbers=dn
    ) + b2.reshape(1, -1, 1, 1)
    return jnp.maximum(h, 0.0)


if __name__ == "__main__":
    # Small shapes consistent with the module: batch=2, in_channels=4,
    # out_channels=8, spatial=16x16  (W*Cout = 128 -> fully lane-dense output).
    N, Cin, Cout, H, W = 2, 4, 8, 16, 16

    key = jax.random.PRNGKey(0)
    kx, kw1, kb1, kw2, kb2 = jax.random.split(key, 5)

    x = jax.random.normal(kx, (N, Cin, H, W), dtype=jnp.float32)
    # Conv2d parameter shapes: OIHW weights, (O,) bias.
    w1 = 0.1 * jax.random.normal(kw1, (Cout, Cin, 3, 3), dtype=jnp.float32)
    b1 = 0.1 * jax.random.normal(kb1, (Cout,), dtype=jnp.float32)
    w2 = 0.1 * jax.random.normal(kw2, (Cout, Cout, 3, 3), dtype=jnp.float32)
    b2 = 0.1 * jax.random.normal(kb2, (Cout,), dtype=jnp.float32)

    out = double_conv_block(x, w1, b1, w2, b2)
    out = jax.block_until_ready(out)

    ref = _reference(x, w1, b1, w2, b2)
    assert out.shape == (N, Cout, H, W)
    assert jnp.allclose(out, ref, atol=1e-4, rtol=1e-4), "mismatch vs reference"

    print("KERNEL_OK")
</pallas_src>

<mosaic_0001>
module attributes {stable_mosaic.version = 11 : i64} {
  func.func @_double_conv_kernel(%arg0: i32, %arg1: memref<1x16x64xf32, #tpu.memory_space<vmem>>, %arg2: memref<3x64x128xf32, #tpu.memory_space<vmem>>, %arg3: memref<1x128xf32, #tpu.memory_space<vmem>>, %arg4: memref<3x128x128xf32, #tpu.memory_space<vmem>>, %arg5: memref<1x128xf32, #tpu.memory_space<vmem>>, %arg6: memref<1x16x128xf32, #tpu.memory_space<vmem>>) attributes {dimension_semantics = [#tpu.dimension_semantics<parallel>], iteration_bounds = array<i64: 2>, scalar_prefetch = 0 : i64, scratch_operands = 0 : i64, tpu.core_type = #tpu.core_type<tc>, window_params = [{transform_indices = @transform_0, window_bounds = array<i64: 1, 16, 64>}, {pipeline_mode = #tpu.pipeline_mode<synchronous>, transform_indices = @transform_1, window_bounds = array<i64: 3, 64, 128>}, {pipeline_mode = #tpu.pipeline_mode<synchronous>, transform_indices = @transform_2, window_bounds = array<i64: 1, 128>}, {pipeline_mode = #tpu.pipeline_mode<synchronous>, transform_indices = @transform_3, window_bounds = array<i64: 3, 128, 128>}, {pipeline_mode = #tpu.pipeline_mode<synchronous>, transform_indices = @transform_4, window_bounds = array<i64: 1, 128>}, {transform_indices = @transform_5, window_bounds = array<i64: 1, 16, 128>}]} {
    %c0 = arith.constant 0 : index
    %c0_0 = arith.constant 0 : index
    %c0_1 = arith.constant 0 : index
    %0 = vector.load %arg1[%c0, %c0_0, %c0_1] : memref<1x16x64xf32, #tpu.memory_space<vmem>>, vector<1x16x64xf32>
    %1 = vector.shape_cast %0 : vector<1x16x64xf32> to vector<16x64xf32>
    %cst = arith.constant 0.000000e+00 : f32
    %2 = vector.broadcast %cst : f32 to vector<1x64xf32>
    %3 = vector.extract_strided_slice %1 {offsets = [0, 0], sizes = [15, 64], strides = [1, 1]} : vector<16x64xf32> to vector<15x64xf32>
    %4 = tpu.concatenate %2, %3 in 0 : vector<1x64xf32>, vector<15x64xf32> -> vector<16x64xf32>
    %5 = vector.extract_strided_slice %1 {offsets = [1, 0], sizes = [15, 64], strides = [1, 1]} : vector<16x64xf32> to vector<15x64xf32>
    %6 = tpu.concatenate %5, %2 in 0 : vector<15x64xf32>, vector<1x64xf32> -> vector<16x64xf32>
    %c0_2 = arith.constant 0 : index
    %c0_3 = arith.constant 0 : index
    %c0_4 = arith.constant 0 : index
    %7 = vector.load %arg2[%c0_2, %c0_3, %c0_4] : memref<3x64x128xf32, #tpu.memory_space<vmem>>, vector<1x64x128xf32>
    %8 = vector.shape_cast %7 : vector<1x64x128xf32> to vector<64x128xf32>
    %cst_5 = arith.constant dense<0.000000e+00> : vector<16x128xf32>
    %9 = tpu.matmul %4, %8, %cst_5 {dimension_numbers = #tpu.dot_dimension_numbers<[1], [0], [0], [1], [0, 0, 1, 1], [], []>} : vector<16x64xf32>, vector<64x128xf32>, vector<16x128xf32> -> vector<16x128xf32>
    %c1 = arith.constant 1 : index
    %c0_6 = arith.constant 0 : index
    %c0_7 = arith.constant 0 : index
    %10 = vector.load %arg2[%c1, %c0_6, %c0_7] : memref<3x64x128xf32, #tpu.memory_space<vmem>>, vector<1x64x128xf32>
    %11 = vector.shape_cast %10 : vector<1x64x128xf32> to vector<64x128xf32>
    %cst_8 = arith.constant dense<0.000000e+00> : vector<16x128xf32>
    %12 = tpu.matmul %1, %11, %cst_8 {dimension_numbers = #tpu.dot_dimension_numbers<[1], [0], [0], [1], [0, 0, 1, 1], [], []>} : vector<16x64xf32>, vector<64x128xf32>, vector<16x128xf32> -> vector<16x128xf32>
    %13 = arith.addf %9, %12 : vector<16x128xf32>
    %c2 = arith.constant 2 : index
    %c0_9 = arith.constant 0 : index
    %c0_10 = arith.constant 0 : index
    %14 = vector.load %arg2[%c2, %c0_9, %c0_10] : memref<3x64x128xf32, #tpu.memory_space<vmem>>, vector<1x64x128xf32>
    %15 = vector.shape_cast %14 : vector<1x64x128xf32> to vector<64x128xf32>
    %cst_11 = arith.constant dense<0.000000e+00> : vector<16x128xf32>
    %16 = tpu.matmul %6, %15, %cst_11 {dimension_numbers = #tpu.dot_dimension_numbers<[1], [0], [0], [1], [0, 0, 1, 1], [], []>} : vector<16x64xf32>, vector<64x128xf32>, vector<16x128xf32> -> vector<16x128xf32>
    %17 = arith.addf %13, %16 : vector<16x128xf32>
    %c0_12 = arith.constant 0 : index
    %c0_13 = arith.constant 0 : index
    %18 = vector.load %arg3[%c0_12, %c0_13] : memref<1x128xf32, #tpu.memory_space<vmem>>, vector<1x128xf32>
    %19 = vector.shape_cast %18 : vector<1x128xf32> to vector<128xf32>
    %20 = vector.shape_cast %19 : vector<128xf32> to vector<1x128xf32>
    %21 = vector.broadcast %20 : vector<1x128xf32> to vector<16x128xf32>
    %22 = arith.addf %17, %21 : vector<16x128xf32>
    %cst_14 = arith.constant 0.000000e+00 : f32
    %23 = vector.broadcast %cst_14 : f32 to vector<16x128xf32>
    %24 = arith.maximumf %22, %23 : vector<16x128xf32>
    %cst_15 = arith.constant 0.000000e+00 : f32
    %25 = vector.broadcast %cst_15 : f32 to vector<1x128xf32>
    %26 = vector.extract_strided_slice %24 {offsets = [0, 0], sizes = [15, 128], strides = [1, 1]} : vector<16x128xf32> to vector<15x128xf32>
    %27 = tpu.concatenate %25, %26 in 0 : vector<1x128xf32>, vector<15x128xf32> -> vector<16x128xf32>
    %28 = vector.extract_strided_slice %24 {offsets = [1, 0], sizes = [15, 128], strides = [1, 1]} : vector<16x128xf32> to vector<15x128xf32>
    %29 = tpu.concatenate %28, %25 in 0 : vector<15x128xf32>, vector<1x128xf32> -> vector<16x128xf32>
    %c0_16 = arith.constant 0 : index
    %c0_17 = arith.constant 0 : index
    %c0_18 = arith.constant 0 : index
    %30 = vector.load %arg4[%c0_16, %c0_17, %c0_18] : memref<3x128x128xf32, #tpu.memory_space<vmem>>, vector<1x128x128xf32>
    %31 = vector.shape_cast %30 : vector<1x128x128xf32> to vector<128x128xf32>
    %cst_19 = arith.constant dense<0.000000e+00> : vector<16x128xf32>
    %32 = tpu.matmul %27, %31, %cst_19 {dimension_numbers = #tpu.dot_dimension_numbers<[1], [0], [0], [1], [0, 0, 1, 1], [], []>} : vector<16x128xf32>, vector<128x128xf32>, vector<16x128xf32> -> vector<16x128xf32>
    %c1_20 = arith.constant 1 : index
    %c0_21 = arith.constant 0 : index
    %c0_22 = arith.constant 0 : index
    %33 = vector.load %arg4[%c1_20, %c0_21, %c0_22] : memref<3x128x128xf32, #tpu.memory_space<vmem>>, vector<1x128x128xf32>
    %34 = vector.shape_cast %33 : vector<1x128x128xf32> to vector<128x128xf32>
    %cst_23 = arith.constant dense<0.000000e+00> : vector<16x128xf32>
    %35 = tpu.matmul %24, %34, %cst_23 {dimension_numbers = #tpu.dot_dimension_numbers<[1], [0], [0], [1], [0, 0, 1, 1], [], []>} : vector<16x128xf32>, vector<128x128xf32>, vector<16x128xf32> -> vector<16x128xf32>
    %36 = arith.addf %32, %35 : vector<16x128xf32>
    %c2_24 = arith.constant 2 : index
    %c0_25 = arith.constant 0 : index
    %c0_26 = arith.constant 0 : index
    %37 = vector.load %arg4[%c2_24, %c0_25, %c0_26] : memref<3x128x128xf32, #tpu.memory_space<vmem>>, vector<1x128x128xf32>
    %38 = vector.shape_cast %37 : vector<1x128x128xf32> to vector<128x128xf32>
    %cst_27 = arith.constant dense<0.000000e+00> : vector<16x128xf32>
    %39 = tpu.matmul %29, %38, %cst_27 {dimension_numbers = #tpu.dot_dimension_numbers<[1], [0], [0], [1], [0, 0, 1, 1], [], []>} : vector<16x128xf32>, vector<128x128xf32>, vector<16x128xf32> -> vector<16x128xf32>
    %40 = arith.addf %36, %39 : vector<16x128xf32>
    %c0_28 = arith.constant 0 : index
    %c0_29 = arith.constant 0 : index
    %41 = vector.load %arg5[%c0_28, %c0_29] : memref<1x128xf32, #tpu.memory_space<vmem>>, vector<1x128xf32>
    %42 = vector.shape_cast %41 : vector<1x128xf32> to vector<128xf32>
    %43 = vector.shape_cast %42 : vector<128xf32> to vector<1x128xf32>
    %44 = vector.broadcast %43 : vector<1x128xf32> to vector<16x128xf32>
    %45 = arith.addf %40, %44 : vector<16x128xf32>
    %cst_30 = arith.constant 0.000000e+00 : f32
    %46 = vector.broadcast %cst_30 : f32 to vector<16x128xf32>
    %47 = arith.maximumf %45, %46 : vector<16x128xf32>
    %48 = vector.shape_cast %47 : vector<16x128xf32> to vector<1x16x128xf32>
    %c0_31 = arith.constant 0 : index
    %c0_32 = arith.constant 0 : index
    %c0_33 = arith.constant 0 : index
    %49 = vector.load %arg6[%c0_31, %c0_32, %c0_33] : memref<1x16x128xf32, #tpu.memory_space<vmem>>, vector<1x16x128xf32>
    tpu.vector_store %arg6[%c0_31, %c0_32, %c0_33], %48 {strides = array<i32>} : memref<1x16x128xf32, #tpu.memory_space<vmem>>, vector<1x16x128xf32>,
    return
  }
  func.func @transform_0(%arg0: i32) -> (i32, i32, i32) {
    %c0_i32 = arith.constant 0 : i32
    %c0_i32_0 = arith.constant 0 : i32
    %c0_i32_1 = arith.constant 0 : i32
    return %arg0, %c0_i32, %c0_i32_0 : i32, i32, i32
  }
  func.func @transform_1(%arg0: i32) -> (i32, i32, i32) {
    %c0_i32 = arith.constant 0 : i32
    %c0_i32_0 = arith.constant 0 : i32
    %c0_i32_1 = arith.constant 0 : i32
    %c0_i32_2 = arith.constant 0 : i32
    return %c0_i32, %c0_i32_0, %c0_i32_1 : i32, i32, i32
  }
  func.func @transform_2(%arg0: i32) -> (i32, i32) {
    %c0_i32 = arith.constant 0 : i32
    %c0_i32_0 = arith.constant 0 : i32
    %c0_i32_1 = arith.constant 0 : i32
    return %c0_i32, %c0_i32_0 : i32, i32
  }
  func.func @transform_3(%arg0: i32) -> (i32, i32, i32) {
    %c0_i32 = arith.constant 0 : i32
    %c0_i32_0 = arith.constant 0 : i32
    %c0_i32_1 = arith.constant 0 : i32
    %c0_i32_2 = arith.constant 0 : i32
    return %c0_i32, %c0_i32_0, %c0_i32_1 : i32, i32, i32
  }
  func.func @transform_4(%arg0: i32) -> (i32, i32) {
    %c0_i32 = arith.constant 0 : i32
    %c0_i32_0 = arith.constant 0 : i32
    %c0_i32_1 = arith.constant 0 : i32
    return %c0_i32, %c0_i32_0 : i32, i32
  }
  func.func @transform_5(%arg0: i32) -> (i32, i32, i32) {
    %c0_i32 = arith.constant 0 : i32
    %c0_i32_0 = arith.constant 0 : i32
    %c0_i32_1 = arith.constant 0 : i32
    return %arg0, %c0_i32, %c0_i32_0 : i32, i32, i32
  }
}

</mosaic_0001>

<llo_original>
// kernel: tpu_custom_call.1
$region0: #{tpu_custom_call.1}
  #allocation0 [shape = 'u32[]', space=smem, size = 0x4, offset = 0x4, fixed_abs, tag = 'smem constant byte address 0x4 - core index']
  #allocation1 [shape = 'u32[72,128]{1,0:T(1,128)}', space=vmem, size = 0x9000, scoped, tag = 'internal scratch']
  %s0 = inlined_call_operand.hbm [shape: f32[2,16,64], index: 0, kind: input, shape index: {}]
  %s1 = inlined_call_operand.hbm [shape: f32[3,64,128], index: 1, kind: input, shape index: {}]
  %s2 = inlined_call_operand.vmem [shape: f32[1,128], index: 2, kind: input, shape index: {}]
  %s3 = inlined_call_operand.hbm [shape: f32[3,128,128], index: 3, kind: input, shape index: {}]
  %s4 = inlined_call_operand.vmem [shape: f32[1,128], index: 4, kind: input, shape index: {}]
  %s5 = inlined_call_operand.hbm [shape: f32[2,16,128], index: 5, kind: output, shape index: {}]
  %s6 = sld [smem:[#allocation0]]
  $region65: #{tpu_custom_call.1} parent=0
    _
  %s8 = ssub.s32 1, %s6
  %s9 = scalar_select 0, %s8, %s6
  $region1: #{tpu_custom_call.1} parent=0
    #allocation2 [shape = 'u8[16384]{0}', space=vmem, size = 0x4000, scoped, tag = 'input window, operand 0']
    #allocation3 [shape = 's32[2]{0}', space=sflag, size = 0x8, scoped, tag = 'scoped memory for tpu_custom_call.1']
    #allocation4 [shape = 's32[2]{0}', space=sflag, size = 0x8, scoped, tag = 'scoped memory for tpu_custom_call.1']
    #allocation5 [shape = 'u8[98304]{0}', space=vmem, size = 0x18000, scoped, tag = 'input window, operand 1, single buffered']
    #allocation6 [shape = 's32[1]{0}', space=sflag, size = 0x4, scoped, tag = 'scoped memory for tpu_custom_call.1']
    #allocation7 [shape = 'u8[196608]{0}', space=vmem, size = 0x30000, scoped, tag = 'input window, operand 3, single buffered']
    #allocation8 [shape = 'u8[16384]{0}', space=vmem, size = 0x4000, scoped, tag = 'output window, operand 0']
    %10 = vsyncpa [#allocation3], 0
    %s11 = scalar_lea.sflag [#allocation3], 1
    %12 = vsyncpa %s11, 0
    %13 = vsyncpa [#allocation6], 0
    %14 = vsyncpa [#allocation4], 0
    %s15 = scalar_lea.sflag [#allocation4], 1
    %16 = vsyncpa %s15, 0
    loop: start=0, step=1, limit=4
    $region2: #{tpu_custom_call.1} parent=1 // loop_pre_header
      _
    $region3: #{tpu_custom_call.1} parent=1 // loop_header
      %s18 = sphi 0, %s22
      %p19 = scmp.ge.s32.totalorder %s18, 4
      %s28 = sphi 0, %s30
      %s31 = sphi 0, %s28
      %s32 = sphi 0, %s31
      %s48 = sphi 0, %s32
      %s52 = sphi 0, %s52
      %s54 = sphi 0, %s52
      %s55 = sphi 0, %s54
      %s69 = sphi 0, %s55
      %s73 = sphi 0, %s73
      %s75 = sphi 0, %s73
      %s76 = sphi 0, %s75
      %s90 = sphi 0, %s76
      %s94 = sphi 0, %s94
      %s96 = sphi 0, %s94
      %s97 = sphi 0, %s96
      %s111 = sphi 0, %s97
      %s115 = sphi 0, %s115
      %s117 = sphi 0, %s115
      %s118 = sphi 0, %s117
      %s132 = sphi 0, %s118
      %s138 = sphi 0, %s140
      %s141 = sphi 0, %s138
      %s142 = sphi 0, %s141
      %s158 = sphi 0, %s142
    $region4: #{tpu_custom_call.1} parent=1 // loop_header_branch
      %21 = sbr.rel (%p19) target = $region8
    $region5: #{tpu_custom_call.1} parent=1 // loop_body
      %s23 = ssub.s32 %s18, 1
      %s24 = ssub.s32 %s18, 2
      %s25 = sadd.s32 %s18, 1
      %s26 = ssub.s32 %s18, %s25
      %p27 = scmp.eq.s32.totalorder %s26, 0
      %s29 = sadd.s32 %s28, 1
      %s30 = scalar_select %p27, %s28, %s29
      %p33 = pneg %p27
      %p34 = scmp.eq.s32.totalorder %s18, 1
      %p35 = por %p33, %p34
      %p36 = scmp.ne.s32.totalorder %s28, %s31
      %p37 = scmp.eq.s32.totalorder %s18, 0
      %p38 = por %p36, %p37
      %p39 = scmp.ne.s32.totalorder %s28, %s31
      %p40 = scmp.eq.s32.totalorder %s23, 1
      %p41 = por %p39, %p40
      %p42 = scmp.ne.s32.totalorder %s31, %s32
      %p43 = scmp.eq.s32.totalorder %s23, 0
      %p44 = por %p42, %p43
      %p45 = scmp.ne.s32.totalorder %s31, %s32
      %p46 = scmp.eq.s32.totalorder %s24, 1
      %p47 = por %p45, %p46
      %p49 = scmp.ne.s32.totalorder %s32, %s48
      %p50 = scmp.eq.s32.totalorder %s24, 0
      %p51 = por %p49, %p50
      %s53 = sadd.s32 %s52, 1
      %p56 = scmp.eq.s32.totalorder %s18, 1
      %p57 = scmp.ne.s32.totalorder %s52, %s54
      %p58 = scmp.eq.s32.totalorder %s18, 0
      %p59 = por %p57, %p58
      %p60 = scmp.ne.s32.totalorder %s52, %s54
      %p61 = scmp.eq.s32.totalorder %s23, 1
      %p62 = por %p60, %p61
      %p63 = scmp.ne.s32.totalorder %s54, %s55
      %p64 = scmp.eq.s32.totalorder %s23, 0
      %p65 = por %p63, %p64
      %p66 = scmp.ne.s32.totalorder %s54, %s55
      %p67 = scmp.eq.s32.totalorder %s24, 1
      %p68 = por %p66, %p67
      %p70 = scmp.ne.s32.totalorder %s55, %s69
      %p71 = scmp.eq.s32.totalorder %s24, 0
      %p72 = por %p70, %p71
      %s74 = sadd.s32 %s73, 1
      %p77 = scmp.eq.s32.totalorder %s18, 1
      %p78 = scmp.ne.s32.totalorder %s73, %s75
      %p79 = scmp.eq.s32.totalorder %s18, 0
      %p80 = por %p78, %p79
      %p81 = scmp.ne.s32.totalorder %s73, %s75
      %p82 = scmp.eq.s32.totalorder %s23, 1
      %p83 = por %p81, %p82
      %p84 = scmp.ne.s32.totalorder %s75, %s76
      %p85 = scmp.eq.s32.totalorder %s23, 0
      %p86 = por %p84, %p85
      %p87 = scmp.ne.s32.totalorder %s75, %s76
      %p88 = scmp.eq.s32.totalorder %s24, 1
      %p89 = por %p87, %p88
      %p91 = scmp.ne.s32.totalorder %s76, %s90
      %p92 = scmp.eq.s32.totalorder %s24, 0
      %p93 = por %p91, %p92
      %s95 = sadd.s32 %s94, 1
      %p98 = scmp.eq.s32.totalorder %s18, 1
      %p99 = scmp.ne.s32.totalorder %s94, %s96
      %p100 = scmp.eq.s32.totalorder %s18, 0
      %p101 = por %p99, %p100
      %p102 = scmp.ne.s32.totalorder %s94, %s96
      %p103 = scmp.eq.s32.totalorder %s23, 1
      %p104 = por %p102, %p103
      %p105 = scmp.ne.s32.totalorder %s96, %s97
      %p106 = scmp.eq.s32.totalorder %s23, 0
      %p107 = por %p105, %p106
      %p108 = scmp.ne.s32.totalorder %s96, %s97
      %p109 = scmp.eq.s32.totalorder %s24, 1
      %p110 = por %p108, %p109
      %p112 = scmp.ne.s32.totalorder %s97, %s111
      %p113 = scmp.eq.s32.totalorder %s24, 0
      %p114 = por %p112, %p113
      %s116 = sadd.s32 %s115, 1
      %p119 = scmp.eq.s32.totalorder %s18, 1
      %p120 = scmp.ne.s32.totalorder %s115, %s117
      %p121 = scmp.eq.s32.totalorder %s18, 0
      %p122 = por %p120, %p121
      %p123 = scmp.ne.s32.totalorder %s115, %s117
      %p124 = scmp.eq.s32.totalorder %s23, 1
      %p125 = por %p123, %p124
      %p126 = scmp.ne.s32.totalorder %s117, %s118
      %p127 = scmp.eq.s32.totalorder %s23, 0
      %p128 = por %p126, %p127
      %p129 = scmp.ne.s32.totalorder %s117, %s118
      %p130 = scmp.eq.s32.totalorder %s24, 1
      %p131 = por %p129, %p130
      %p133 = scmp.ne.s32.totalorder %s118, %s132
      %p134 = scmp.eq.s32.totalorder %s24, 0
      %p135 = por %p133, %p134
      %s136 = ssub.s32 %s18, %s25
      %p137 = scmp.eq.s32.totalorder %s136, 0
      %s139 = sadd.s32 %s138, 1
      %s140 = scalar_select %p137, %s138, %s139
      %p143 = pneg %p137
      %p144 = scmp.eq.s32.totalorder %s18, 1
      %p145 = por %p143, %p144
      %p146 = scmp.ne.s32.totalorder %s138, %s141
      %p147 = scmp.eq.s32.totalorder %s18, 0
      %p148 = por %p146, %p147
      %p149 = scmp.ne.s32.totalorder %s138, %s141
      %p150 = scmp.eq.s32.totalorder %s23, 1
      %p151 = por %p149, %p150
      %p152 = scmp.ne.s32.totalorder %s141, %s142
      %p153 = scmp.eq.s32.totalorder %s23, 0
      %p154 = por %p152, %p153
      %p155 = scmp.ne.s32.totalorder %s141, %s142
      %p156 = scmp.eq.s32.totalorder %s24, 1
      %p157 = por %p155, %p156
      %p159 = scmp.ne.s32.totalorder %s142, %s158
      %p160 = scmp.eq.s32.totalorder %s24, 0
      %p161 = por %p159, %p160
      %p162 = scmp.le.s32.totalorder 1, %s18
      %p163 = scmp.lt.s32.totalorder %s18, 3
      %p164 = pnand %p162, %p163
      %p165 = pneg %p164
      // Predicated region
      $region9: #{tpu_custom_call.1} parent=5 // pred_check
        _
      $region10: #{tpu_custom_call.1} parent=5 // pred_check_branch
        %167 = sbr.rel (%p164) target = $region12
      $region11: #{tpu_custom_call.1} parent=5 // pred_region
        %s168 = ssub.s32 %s18, 1
        // Predicated region
        $region13: #{tpu_custom_call.1} parent=11 // pred_check
          %p169 = pneg %p65
        $region14: #{tpu_custom_call.1} parent=11 // pred_check_branch
          %171 = sbr.rel (%p169) target = $region16
        $region15: #{tpu_custom_call.1} parent=11 // pred_region
          %173 = vsyncadd [#allocation6], 0
          %s174 = sshll.u32 %s1, 4
          %s175 = int_to_ptr.hbm [resolvable:$true] %s174
          %s176 = sshll.u32 [#allocation5], 4
          %s177 = int_to_ptr.vmem [resolvable:$true] %s176
          %182 = dma.hbm_to_vmem [thread:$0]  %s175, 3072, %s177, [#allocation6], 128, 128, 8
        $region16: #{tpu_custom_call.1} parent=11 // pred_fallthru
          _
        // Predicated region
        $region17: #{tpu_custom_call.1} parent=11 // pred_check
          %p183 = pneg %p86
        $region18: #{tpu_custom_call.1} parent=11 // pred_check_branch
          %185 = sbr.rel (%p183) target = $region20
        $region19: #{tpu_custom_call.1} parent=11 // pred_region
          _
        $region20: #{tpu_custom_call.1} parent=11 // pred_fallthru
          _
        // Predicated region
        $region21: #{tpu_custom_call.1} parent=11 // pred_check
          %p186 = pneg %p107
        $region22: #{tpu_custom_call.1} parent=11 // pred_check_branch
          %188 = sbr.rel (%p186) target = $region24
        $region23: #{tpu_custom_call.1} parent=11 // pred_region
          %190 = vsyncadd [#allocation6], 0
          %s191 = sshll.u32 %s3, 4
          %s192 = int_to_ptr.hbm [resolvable:$true] %s191
          %s193 = sshll.u32 [#allocation7], 4
          %s194 = int_to_ptr.vmem [resolvable:$true] %s193
          %199 = dma.hbm_to_vmem [thread:$0]  %s192, 6144, %s194, [#allocation6], 128, 128, 8
        $region24: #{tpu_custom_call.1} parent=11 // pred_fallthru
          _
        // Predicated region
        $region25: #{tpu_custom_call.1} parent=11 // pred_check
          %p200 = pneg %p128
        $region26: #{tpu_custom_call.1} parent=11 // pred_check_branch
          %202 = sbr.rel (%p200) target = $region28
        $region27: #{tpu_custom_call.1} parent=11 // pred_region
          _
        $region28: #{tpu_custom_call.1} parent=11 // pred_fallthru
          _
      $region12: #{tpu_custom_call.1} parent=5 // pred_fallthru
        _
      %p203 = scmp.lt.s32.totalorder %s18, 2
      // Predicated region
      $region29: #{tpu_custom_call.1} parent=5 // pred_check
        %p204 = pneg %p203
      $region30: #{tpu_custom_call.1} parent=5 // pred_check_branch
        %206 = sbr.rel (%p204) target = $region32
      $region31: #{tpu_custom_call.1} parent=5 // pred_region
        // Predicated region
        $region33: #{tpu_custom_call.1} parent=31 // pred_check
          %p207 = pneg %p38
        $region34: #{tpu_custom_call.1} parent=31 // pred_check_branch
          %209 = sbr.rel (%p207) target = $region36
        $region35: #{tpu_custom_call.1} parent=31 // pred_region
          %s210 = sand.u32 %s28, 1
          %s211 = scalar_lea.sflag [#allocation3], %s210
          %s212 = sand.u32 %s28, 1
          %s213 = smul.addr %s212, 16
          %s214 = scalar_lea.vmem [#allocation2], %s213
          %216 = vsyncadd %s211, 0
          %s217 = smul.addr %s18, 2
          %s218 = smul.addr %s217, 8
          %s219 = scalar_lea.hbm %s0, %s218
          %s220 = sshll.u32 %s219, 4
          %s221 = int_to_ptr.hbm [resolvable:$true] %s220
          %s222 = sshll.u32 %s214, 4
          %s223 = int_to_ptr.vmem [resolvable:$true] %s222
          %228 = dma.hbm_to_vmem [thread:$0]  %s221, 256, %s223, %s211, 128, 128, 8
        $region36: #{tpu_custom_call.1} parent=31 // pred_fallthru
          _
      $region32: #{tpu_custom_call.1} parent=5 // pred_fallthru
        _
      %p229 = scmp.le.s32.totalorder 1, %s18
      %p230 = scmp.lt.s32.totalorder %s18, 3
      %p231 = pnand %p229, %p230
      %p232 = pneg %p231
      // Predicated region
      $region37: #{tpu_custom_call.1} parent=5 // pred_check
        _
      $region38: #{tpu_custom_call.1} parent=5 // pred_check_branch
        %234 = sbr.rel (%p231) target = $region40
      $region39: #{tpu_custom_call.1} parent=5 // pred_region
        %s235 = ssub.s32 %s18, 1
        %s236 = sand.u32 %s31, 1
        %s237 = scalar_lea.sflag [#allocation3], %s236
        %s238 = sand.u32 %s31, 1
        %s239 = smul.addr %s238, 16
        %s240 = scalar_lea.vmem [#allocation2], %s239
        // Predicated region
        $region41: #{tpu_custom_call.1} parent=39 // pred_check
          %p241 = pneg %p44
        $region42: #{tpu_custom_call.1} parent=39 // pred_check_branch
          %243 = sbr.rel (%p241) target = $region44
        $region43: #{tpu_custom_call.1} parent=39 // pred_region
          %245 = dma.done %s237, 256
        $region44: #{tpu_custom_call.1} parent=39 // pred_fallthru
          _
        // Predicated region
        $region45: #{tpu_custom_call.1} parent=39 // pred_check
          %p246 = pneg %p65
        $region46: #{tpu_custom_call.1} parent=39 // pred_check_branch
          %248 = sbr.rel (%p246) target = $region48
        $region47: #{tpu_custom_call.1} parent=39 // pred_region
          %250 = dma.done [#allocation6], 3072
        $region48: #{tpu_custom_call.1} parent=39 // pred_fallthru
          _
        // Predicated region
        $region49: #{tpu_custom_call.1} parent=39 // pred_check
          %p251 = pneg %p107
        $region50: #{tpu_custom_call.1} parent=39 // pred_check_branch
          %253 = sbr.rel (%p251) target = $region52
        $region51: #{tpu_custom_call.1} parent=39 // pred_region
          %255 = dma.done [#allocation6], 6144
        $region52: #{tpu_custom_call.1} parent=39 // pred_fallthru
          _
        %s256 = sand.u32 %s31, 1
        %s257 = scalar_lea.sflag [#allocation3], %s256
        %s258 = sand.u32 %s31, 1
        %s259 = smul.addr %s258, 16
        %s260 = scalar_lea.vmem [#allocation2], %s259
        %p261 = pneg %p44
        %p262 = pneg %p41
        %p263 = pneg %p65
        %p264 = pneg %p62
        %p265 = pneg %p86
        %p266 = pneg %p83
        %p267 = pneg %p107
        %p268 = pneg %p104
        %p269 = pneg %p128
        %p270 = pneg %p125
        %p271 = pneg %p154
        %p272 = pneg %p151
        %s273 = sand.u32 %s141, 1
        %s274 = scalar_lea.sflag [#allocation4], %s273
        %s275 = sand.u32 %s141, 1
        %s276 = smul.addr %s275, 16
        %s277 = scalar_lea.vmem [#allocation8], %s276
        %v278 = vld [vmem:[%s240] sm:$0xff]
        %v279 = vld [vmem:[%s240 + $0x8] sm:$0xff]
        %vm282 = vcmask 1040384
        %v283 = vrot.slane %v278, 7
        %v284 = vrot.slane %v279, 7
        %v285 = vsel %vm282, %v283, %v284
        %v287 = vsel %vm282, 0.0, %v283
        %vm288 = vcmask 1046528
        %v289 = vrot.slane %v278, 1
        %v290 = vrot.slane %v279, 1
        %v291 = vsel %vm288, %v289, %v290
        %v293 = vsel %vm288, %v290, 0.0
        %v294 = vld [vmem:[#allocation5] sm:$0xff]
        %v295 = vld [vmem:[#allocation5 + $0x8] sm:$0xff]
        %v296 = vld [vmem:[#allocation5 + $0x10] sm:$0xff]
        %v297 = vld [vmem:[#allocation5 + $0x18] sm:$0xff]
        %v298 = vld [vmem:[#allocation5 + $0x20] sm:$0xff]
        %v299 = vld [vmem:[#allocation5 + $0x28] sm:$0xff]
        %v300 = vld [vmem:[#allocation5 + $0x30] sm:$0xff]
        %v301 = vld [vmem:[#allocation5 + $0x38] sm:$0xff]
        %s302 = scalar_lea.vmem [#allocation5], 64
        %v303 = vld [vmem:[%s302] sm:$0xff]
        %v304 = vld [vmem:[%s302 + $0x8] sm:$0xff]
        %v305 = vld [vmem:[%s302 + $0x10] sm:$0xff]
        %v306 = vld [vmem:[%s302 + $0x18] sm:$0xff]
        %v307 = vld [vmem:[%s302 + $0x20] sm:$0xff]
        %v308 = vld [vmem:[%s302 + $0x28] sm:$0xff]
        %v309 = vld [vmem:[%s302 + $0x30] sm:$0xff]
        %v310 = vld [vmem:[%s302 + $0x38] sm:$0xff]
        %vm311 = vcmask 523264
        %v312 = vsel %vm311, %v278, 0
        %v314 = vsel %vm311, %v279, 0
        %316 = vmatpush.msra.mxu0 0.0
        %317 = vmatpush.msra.mxu0 0.0
        %318 = vmatpush.msra.mxu0 0.0
        %319 = vmatpush.msra.mxu0 0.0
        %320 = vmatpush.msra.mxu0 0.0
        %321 = vmatpush.msra.mxu0 0.0
        %322 = vmatpush.msra.mxu0 0.0
        %323 = vmatpush.msra.mxu0 0.0
        %324 = vmatpush.msra.mxu0 %v310
        %325 = vmatpush.msra.mxu0 %v309
        %326 = vmatpush.msra.mxu0 %v308
        %327 = vmatpush.msra.mxu0 %v307
        %328 = vmatpush.msra.mxu0 %v306
        %329 = vmatpush.msra.mxu0 %v305
        %330 = vmatpush.msra.mxu0 %v304
        %331 = vmatpush.msra.mxu0 %v303
        %332 = vmatmul.f32.gmra.mxu0 %v312
        %v333 = vpop.f32.mrf.mxu0
        %v334 = vadd.f32 0.0, %v333
        %335 = vmatmul.f32.gmra.mxu0 %v314
        %v336 = vpop.f32.mrf.mxu0
        %v337 = vadd.f32 0.0, %v336
        %338 = vdwg.mxu0
        %v340 = vsel %vm311, %v287, 0
        %v342 = vsel %vm311, %v285, 0
        %344 = vmatpush.msra.mxu0 0.0
        %345 = vmatpush.msra.mxu0 0.0
        %346 = vmatpush.msra.mxu0 0.0
        %347 = vmatpush.msra.mxu0 0.0
        %348 = vmatpush.msra.mxu0 0.0
        %349 = vmatpush.msra.mxu0 0.0
        %350 = vmatpush.msra.mxu0 0.0
        %351 = vmatpush.msra.mxu0 0.0
        %352 = vmatpush.msra.mxu0 %v301
        %353 = vmatpush.msra.mxu0 %v300
        %354 = vmatpush.msra.mxu0 %v299
        %355 = vmatpush.msra.mxu0 %v298
        %356 = vmatpush.msra.mxu0 %v297
        %357 = vmatpush.msra.mxu0 %v296
        %358 = vmatpush.msra.mxu0 %v295
        %359 = vmatpush.msra.mxu0 %v294
        %360 = vmatmul.f32.gmra.mxu0 %v340
        %v361 = vpop.f32.mrf.mxu0
        %v362 = vadd.f32 %v334, %v361
        %363 = vmatmul.f32.gmra.mxu0 %v342
        %v364 = vpop.f32.mrf.mxu0
        %v365 = vadd.f32 %v337, %v364
        %366 = vdwg.mxu0
        %s367 = scalar_lea.vmem [#allocation5], 128
        %v368 = vld [vmem:[%s367] sm:$0xff]
        %v369 = vld [vmem:[%s367 + $0x8] sm:$0xff]
        %v370 = vld [vmem:[%s367 + $0x10] sm:$0xff]
        %v371 = vld [vmem:[%s367 + $0x18] sm:$0xff]
        %v372 = vld [vmem:[%s367 + $0x20] sm:$0xff]
        %v373 = vld [vmem:[%s367 + $0x28] sm:$0xff]
        %v374 = vld [vmem:[%s367 + $0x30] sm:$0xff]
        %v375 = vld [vmem:[%s367 + $0x38] sm:$0xff]
        %v376 = vsel %vm311, %v291, 0
        %v379 = vsel %vm311, %v293, 0
        %381 = vmatpush.msra.mxu0 0.0
        %382 = vmatpush.msra.mxu0 0.0
        %383 = vmatpush.msra.mxu0 0.0
        %384 = vmatpush.msra.mxu0 0.0
        %385 = vmatpush.msra.mxu0 0.0
        %386 = vmatpush.msra.mxu0 0.0
        %387 = vmatpush.msra.mxu0 0.0
        %388 = vmatpush.msra.mxu0 0.0
        %389 = vmatpush.msra.mxu0 %v375
        %390 = vmatpush.msra.mxu0 %v374
        %391 = vmatpush.msra.mxu0 %v373
        %392 = vmatpush.msra.mxu0 %v372
        %393 = vmatpush.msra.mxu0 %v371
        %394 = vmatpush.msra.mxu0 %v370
        %395 = vmatpush.msra.mxu0 %v369
        %396 = vmatpush.msra.mxu0 %v368
        %397 = vmatmul.f32.gmra.mxu0 %v376
        %v398 = vpop.f32.mrf.mxu0
        %v399 = vadd.f32 0.0, %v398
        %400 = vmatmul.f32.gmra.mxu0 %v379
        %v401 = vpop.f32.mrf.mxu0
        %v402 = vadd.f32 0.0, %v401
        %403 = vdwg.mxu0
        %v404 = vadd.f32 %v362, %v399
        %v405 = vadd.f32 %v365, %v402
        %v406 = vld [vmem:[%s2] sm:$0x1]
        %v408 = vperm.slane %v406, 0
        %v410 = vadd.f32 %v404, %v408
        %v411 = vadd.f32 %v405, %v408
        %v412 = vmax.f32 %v410, 0.0
        %v413 = vmax.f32 %v411, 0.0
        %v416 = vrot.slane %v412, 7
        %v417 = vrot.slane %v413, 7
        %v418 = vsel %vm282, %v416, %v417
        %v421 = vsel %vm282, 0.0, %v416
        %v422 = vrot.slane %v412, 1
        %v423 = vrot.slane %v413, 1
        %v424 = vsel %vm288, %v422, %v423
        %v427 = vsel %vm288, %v423, 0.0
        %v428 = vld [vmem:[#allocation7] sm:$0xff]
        %v429 = vld [vmem:[#allocation7 + $0x8] sm:$0xff]
        %v430 = vld [vmem:[#allocation7 + $0x10] sm:$0xff]
        %v431 = vld [vmem:[#allocation7 + $0x18] sm:$0xff]
        %v432 = vld [vmem:[#allocation7 + $0x20] sm:$0xff]
        %v433 = vld [vmem:[#allocation7 + $0x28] sm:$0xff]
        %v434 = vld [vmem:[#allocation7 + $0x30] sm:$0xff]
        %v435 = vld [vmem:[#allocation7 + $0x38] sm:$0xff]
        %v436 = vld [vmem:[#allocation7 + $0x40] sm:$0xff]
        %v437 = vld [vmem:[#allocation7 + $0x48] sm:$0xff]
        %v438 = vld [vmem:[#allocation7 + $0x50] sm:$0xff]
        %v439 = vld [vmem:[#allocation7 + $0x58] sm:$0xff]
        %v440 = vld [vmem:[#allocation7 + $0x60] sm:$0xff]
        %v441 = vld [vmem:[#allocation7 + $0x68] sm:$0xff]
        %v442 = vld [vmem:[#allocation7 + $0x70] sm:$0xff]
        %v443 = vld [vmem:[#allocation7 + $0x78] sm:$0xff]
        %s444 = scalar_lea.vmem [#allocation7], 128
        %v445 = vld [vmem:[%s444] sm:$0xff]
        %v446 = vld [vmem:[%s444 + $0x8] sm:$0xff]
        %v447 = vld [vmem:[%s444 + $0x10] sm:$0xff]
        %v448 = vld [vmem:[%s444 + $0x18] sm:$0xff]
        %v449 = vld [vmem:[%s444 + $0x20] sm:$0xff]
        %v450 = vld [vmem:[%s444 + $0x28] sm:$0xff]
        %v451 = vld [vmem:[%s444 + $0x30] sm:$0xff]
        %v452 = vld [vmem:[%s444 + $0x38] sm:$0xff]
        %v453 = vld [vmem:[%s444 + $0x40] sm:$0xff]
        %v454 = vld [vmem:[%s444 + $0x48] sm:$0xff]
        %v455 = vld [vmem:[%s444 + $0x50] sm:$0xff]
        %v456 = vld [vmem:[%s444 + $0x58] sm:$0xff]
        %v457 = vld [vmem:[%s444 + $0x60] sm:$0xff]
        %v458 = vld [vmem:[%s444 + $0x68] sm:$0xff]
        %v459 = vld [vmem:[%s444 + $0x70] sm:$0xff]
        %v460 = vld [vmem:[%s444 + $0x78] sm:$0xff]
        %461 = vmatpush.msra.mxu0 %v460
        %462 = vmatpush.msra.mxu0 %v459
        %463 = vmatpush.msra.mxu0 %v458
        %464 = vmatpush.msra.mxu0 %v457
        %465 = vmatpush.msra.mxu0 %v456
        %466 = vmatpush.msra.mxu0 %v455
        %467 = vmatpush.msra.mxu0 %v454
        %468 = vmatpush.msra.mxu0 %v453
        %469 = vmatpush.msra.mxu0 %v452
        %470 = vmatpush.msra.mxu0 %v451
        %471 = vmatpush.msra.mxu0 %v450
        %472 = vmatpush.msra.mxu0 %v449
        %473 = vmatpush.msra.mxu0 %v448
        %474 = vmatpush.msra.mxu0 %v447
        %475 = vmatpush.msra.mxu0 %v446
        %476 = vmatpush.msra.mxu0 %v445
        %477 = vmatmul.f32.gmra.mxu0 %v412
        %v478 = vpop.f32.mrf.mxu0
        %v479 = vadd.f32 0.0, %v478
        %480 = vmatmul.f32.gmra.mxu0 %v413
        %v481 = vpop.f32.mrf.mxu0
        %v482 = vadd.f32 0.0, %v481
        %483 = vdwg.mxu0
        %484 = vmatpush.msra.mxu0 %v443
        %485 = vmatpush.msra.mxu0 %v442
        %486 = vmatpush.msra.mxu0 %v441
        %487 = vmatpush.msra.mxu0 %v440
        %488 = vmatpush.msra.mxu0 %v439
        %489 = vmatpush.msra.mxu0 %v438
        %490 = vmatpush.msra.mxu0 %v437
        %491 = vmatpush.msra.mxu0 %v436
        %492 = vmatpush.msra.mxu0 %v435
        %493 = vmatpush.msra.mxu0 %v434
        %494 = vmatpush.msra.mxu0 %v433
        %495 = vmatpush.msra.mxu0 %v432
        %496 = vmatpush.msra.mxu0 %v431
        %497 = vmatpush.msra.mxu0 %v430
        %498 = vmatpush.msra.mxu0 %v429
        %499 = vmatpush.msra.mxu0 %v428
        %500 = vmatmul.f32.gmra.mxu0 %v421
        %v501 = vpop.f32.mrf.mxu0
        %v502 = vadd.f32 %v479, %v501
        %503 = vmatmul.f32.gmra.mxu0 %v418
        %v504 = vpop.f32.mrf.mxu0
        %v505 = vadd.f32 %v482, %v504
        %506 = vdwg.mxu0
        %s507 = scalar_lea.vmem [#allocation7], 256
        %v508 = vld [vmem:[%s507] sm:$0xff]
        %v509 = vld [vmem:[%s507 + $0x8] sm:$0xff]
        %v510 = vld [vmem:[%s507 + $0x10] sm:$0xff]
        %v511 = vld [vmem:[%s507 + $0x18] sm:$0xff]
        %v512 = vld [vmem:[%s507 + $0x20] sm:$0xff]
        %v513 = vld [vmem:[%s507 + $0x28] sm:$0xff]
        %v514 = vld [vmem:[%s507 + $0x30] sm:$0xff]
        %v515 = vld [vmem:[%s507 + $0x38] sm:$0xff]
        %v516 = vld [vmem:[%s507 + $0x40] sm:$0xff]
        %v517 = vld [vmem:[%s507 + $0x48] sm:$0xff]
        %v518 = vld [vmem:[%s507 + $0x50] sm:$0xff]
        %v519 = vld [vmem:[%s507 + $0x58] sm:$0xff]
        %v520 = vld [vmem:[%s507 + $0x60] sm:$0xff]
        %v521 = vld [vmem:[%s507 + $0x68] sm:$0xff]
        %v522 = vld [vmem:[%s507 + $0x70] sm:$0xff]
        %v523 = vld [vmem:[%s507 + $0x78] sm:$0xff]
        %524 = vmatpush.msra.mxu0 %v523
        %525 = vmatpush.msra.mxu0 %v522
        %526 = vmatpush.msra.mxu0 %v521
        %527 = vmatpush.msra.mxu0 %v520
        %528 = vmatpush.msra.mxu0 %v519
        %529 = vmatpush.msra.mxu0 %v518
        %530 = vmatpush.msra.mxu0 %v517
        %531 = vmatpush.msra.mxu0 %v516
        %532 = vmatpush.msra.mxu0 %v515
        %533 = vmatpush.msra.mxu0 %v514
        %534 = vmatpush.msra.mxu0 %v513
        %535 = vmatpush.msra.mxu0 %v512
        %536 = vmatpush.msra.mxu0 %v511
        %537 = vmatpush.msra.mxu0 %v510
        %538 = vmatpush.msra.mxu0 %v509
        %539 = vmatpush.msra.mxu0 %v508
        %540 = vmatmul.f32.gmra.mxu0 %v424
        %v541 = vpop.f32.mrf.mxu0
        %v542 = vadd.f32 0.0, %v541
        %543 = vmatmul.f32.gmra.mxu0 %v427
        %v544 = vpop.f32.mrf.mxu0
        %v545 = vadd.f32 0.0, %v544
        %546 = vdwg.mxu0
        %v547 = vadd.f32 %v502, %v542
        %v548 = vadd.f32 %v505, %v545
        %v549 = vld [vmem:[%s4] sm:$0x1]
        %v551 = vperm.slane %v549, 0
        %v553 = vadd.f32 %v547, %v551
        %v554 = vadd.f32 %v548, %v551
        %v555 = vmax.f32 %v553, 0.0
        %v556 = vmax.f32 %v554, 0.0
        %557 = vst [vmem:[%s277] sm:$0xff] %v555
        %558 = vst [vmem:[%s277 + $0x8] sm:$0xff] %v556
        %s559 = sand.u32 %s141, 1
        %s560 = scalar_lea.sflag [#allocation4], %s559
        %s561 = sand.u32 %s141, 1
        %s562 = smul.addr %s561, 16
        %s563 = scalar_lea.vmem [#allocation8], %s562
        // Predicated region
        $region53: #{tpu_custom_call.1} parent=39 // pred_check
          %p564 = pneg %p151
        $region54: #{tpu_custom_call.1} parent=39 // pred_check_branch
          %566 = sbr.rel (%p564) target = $region56
        $region55: #{tpu_custom_call.1} parent=39 // pred_region
          %568 = vsyncadd %s560, 0
          %s569 = smul.addr %s23, 2
          %s570 = smul.addr %s569, 8
          %s571 = scalar_lea.hbm %s5, %s570
          %s572 = sshll.u32 %s563, 4
          %s573 = int_to_ptr.vmem [resolvable:$true] %s572
          %s574 = sshll.u32 %s571, 4
          %s575 = int_to_ptr.hbm [resolvable:$true] %s574
          %580 = dma.vmem_to_hbm [thread:$0]  %s573, 256, %s575, %s560, 128, 128, 8
        $region56: #{tpu_custom_call.1} parent=39 // pred_fallthru
          _
      $region40: #{tpu_custom_call.1} parent=5 // pred_fallthru
        _
      %p581 = scmp.le.s32.totalorder 2, %s18
      // Predicated region
      $region57: #{tpu_custom_call.1} parent=5 // pred_check
        %p582 = pneg %p581
      $region58: #{tpu_custom_call.1} parent=5 // pred_check_branch
        %584 = sbr.rel (%p582) target = $region60
      $region59: #{tpu_custom_call.1} parent=5 // pred_region
        %s585 = ssub.s32 %s18, 2
        // Predicated region
        $region61: #{tpu_custom_call.1} parent=59 // pred_check
          %p586 = pneg %p157
        $region62: #{tpu_custom_call.1} parent=59 // pred_check_branch
          %588 = sbr.rel (%p586) target = $region64
        $region63: #{tpu_custom_call.1} parent=59 // pred_region
          %s589 = sand.u32 %s142, 1
          %s590 = scalar_lea.sflag [#allocation4], %s589
          %s591 = sand.u32 %s142, 1
          %s592 = smul.addr %s591, 16
          %s593 = scalar_lea.vmem [#allocation8], %s592
          %595 = dma.done %s590, 256
        $region64: #{tpu_custom_call.1} parent=59 // pred_fallthru
          _
      $region60: #{tpu_custom_call.1} parent=5 // pred_fallthru
        _
    $region6: #{tpu_custom_call.1} parent=1 // loop_footer
      %s22 = sadd.s32 1, %s18
    $region7: #{tpu_custom_call.1} parent=1 // loop_footer_branch
      %17 = sbr.rel target = $region3
    $region8: #{tpu_custom_call.1} parent=1 // loop_exit
      _
    %596 = vsyncpa [#allocation3], 1
    %s597 = scalar_lea.sflag [#allocation3], 1
    %598 = vsyncpa %s597, 1
    %599 = vsyncpa [#allocation6], 1
    %600 = vsyncpa [#allocation4], 1
    %s601 = scalar_lea.sflag [#allocation4], 1
    %602 = vsyncpa %s601, 1

</llo_original>
